<compile_context>
chip_gen: v7x
topology: tpu7x:2x2x1
jax: 0.10.0
libtpu: 0.0.40
codegen_flags: <defaults>
</compile_context>

<pallas_src>
import functools
import math

import jax
import jax.numpy as jnp
from jax import lax
from jax.experimental import pallas as pl
from jax.experimental.pallas import tpu as pltpu


def _mcl_kernel(n_rows, tile_n, tiles_per_half, total_tiles, needs_mask,
                scalars_ref, target_ref, output_ref, loss_ref):
    # scalars_ref: (2,) f32 SMEM  -> [ (beta-1)*exp(-70), log(beta) ]
    # target_ref : (tile_n, 1) i32 VMEM
    # output_ref : (tile_n, C) logits, native dtype, VMEM
    # loss_ref   : (1, 1, 1) f32 VMEM, resident accumulator for this half
    p = pl.program_id(0)            # "parallel" half (TensorCore split on v7x)
    i = pl.program_id(1)            # "arbitrary" tile index within the half
    t = p * tiles_per_half + i      # logical (unclamped) tile index

    @pl.when(i == 0)
    def _():
        loss_ref[...] = jnp.zeros_like(loss_ref)

    raw = output_ref[...]                       # (tile_n, C), native dtype
    tgt = target_ref[...]                       # (tile_n, 1) int32
    tn, c = raw.shape

    # gather(1, target) as a one-hot masked row reduction on the native-dtype
    # tile (exact: exactly one nonzero per row); cast only the result to f32.
    col_ids = lax.broadcasted_iota(jnp.int32, (1, c), 1)
    sel = col_ids == tgt                        # (tile_n, C) via broadcast
    c_output = jnp.sum(jnp.where(sel, raw, jnp.zeros_like(raw)),
                       axis=1, keepdims=True).astype(jnp.float32)

    # NOTE: the fixed -70 shift mirrors the PyTorch reference (NOT a
    # max-stabilized logsumexp); terms with (x_j - x_target) < ~-17 underflow
    # to 0 in f32 (negligible contribution), same as the reference.
    exp_minus = jnp.exp(raw.astype(jnp.float32) - (c_output + 70.0))
    row_sum = jnp.sum(exp_minus, axis=1, keepdims=True)

    const = scalars_ref[0]                      # (beta - 1) * exp(-70)
    log_beta = scalars_ref[1]
    per_row = jnp.log(row_sum + const) + 70.0 - log_beta   # (tile_n, 1)

    if needs_mask:
        # Only the last real tile (possibly partial) and clamped duplicate
        # tiles (t >= total_tiles) contain rows >= n_rows.
        is_edge = t >= total_tiles - 1

        @pl.when(jnp.logical_not(is_edge))
        def _():
            loss_ref[...] += jnp.sum(per_row)

        @pl.when(is_edge)
        def _():
            row_ids = t * tile_n + lax.broadcasted_iota(jnp.int32, (tn, 1), 0)
            loss_ref[...] += jnp.sum(jnp.where(row_ids < n_rows, per_row, 0.0))
    else:
        loss_ref[...] += jnp.sum(per_row)


def _vmem_limit_bytes():
    cap = None
    try:
        cap = getattr(pltpu.get_tpu_info(), "vmem_capacity_bytes", None)
    except Exception:
        cap = None
    if not cap or cap <= 0:
        cap = 64 * 1024 * 1024            # conservative fallback: v7x per-TC VMEM
    # leave ~1/8 of physical VMEM as headroom for the compiler
    return int(min(cap * 7 // 8, 120 * 1024 * 1024))


def _choose_tile_n(n, c, itemsize, vmem_limit):
    # Size the tile by BYTES: double-buffered native-dtype logits, double-
    # buffered lane-padded (->128 lanes) int32 target blocks, and ~4 tile-sized
    # f32 in-kernel temporaries must all fit under the scoped VMEM limit.
    avail = max(8 * 1024 * 1024, vmem_limit - 6 * 1024 * 1024)
    per_row = (2 * c * itemsize           # logits, x2 pipeline buffers
               + 2 * 128 * 4              # target block padded to 128 lanes, x2
               + 4 * c * 4                # f32 temporaries (cast, exp, sums)
               + 64)                      # per-row (., 1) vectors
    t = avail // per_row
    t = max(8, (min(int(t), 1 << 16) // 8) * 8)
    if n <= t:
        return n                          # single block along N (block == full dim)
    return t


def mcl_forward(output, target, beta, tile_n=None):
    """Pallas implementation of pytorch_mcl.mcl.forward(output, target, Beta)."""
    n, c = output.shape
    target2d = target.astype(jnp.int32).reshape(n, 1)

    beta_f = jnp.asarray(beta, dtype=jnp.float32)
    scalars = jnp.stack([(beta_f - 1.0) * jnp.float32(math.exp(-70.0)),
                         jnp.log(beta_f)])              # (2,) f32 -> SMEM prefetch

    vmem_limit = _vmem_limit_bytes()
    if tile_n is None:
        tile_n = _choose_tile_n(n, c, output.dtype.itemsize, vmem_limit)
    tile_n = min(tile_n, n)

    total_tiles = pl.cdiv(n, tile_n)
    tiles_per_half = pl.cdiv(total_tiles, 2)            # 2-way TC split (v7x)
    needs_mask = (n % tile_n != 0) or (2 * tiles_per_half != total_tiles)

    def tile_index(p_idx, i_idx):
        # clamp duplicated tiles in the second half to a valid block; their
        # rows are discarded in-kernel by the row mask.
        return jnp.minimum(p_idx * tiles_per_half + i_idx, total_tiles - 1)

    kernel = functools.partial(_mcl_kernel, n, tile_n, tiles_per_half,
                               total_tiles, needs_mask)

    partials = pl.pallas_call(
        kernel,
        out_shape=jax.ShapeDtypeStruct((2, 1, 1), jnp.float32),
        grid_spec=pltpu.PrefetchScalarGridSpec(
            num_scalar_prefetch=1,
            grid=(2, tiles_per_half),
            in_specs=[
                pl.BlockSpec((tile_n, 1), lambda p, i, s: (tile_index(p, i), 0)),
                pl.BlockSpec((tile_n, c), lambda p, i, s: (tile_index(p, i), 0)),
            ],
            out_specs=pl.BlockSpec((1, 1, 1), lambda p, i, s: (p, 0, 0)),
        ),
        compiler_params=pltpu.CompilerParams(
            dimension_semantics=("parallel", "arbitrary"),
            vmem_limit_bytes=vmem_limit),
        cost_estimate=pl.CostEstimate(
            flops=5 * n * c,
            transcendentals=n * c + n,
            bytes_accessed=n * c * output.dtype.itemsize + n * 4 + 16),
    )(scalars, target2d, output)

    # hard-coded /100 divisor copied from the PyTorch reference (not a mean over N)
    return jnp.sum(partials) * jnp.float32(0.01)


def _mcl_reference(output, target, beta):
    # pure-JAX reference mirroring the PyTorch _mcl
    out = output.astype(jnp.float32)
    c_output = jnp.take_along_axis(out, target[:, None].astype(jnp.int32), axis=1)
    exp_minus = jnp.exp(out - c_output - 70.0)
    return jnp.sum(
        jnp.log(jnp.sum(exp_minus, axis=1) + (beta - 1.0) * math.exp(-70.0))
        + 70.0 - math.log(beta)
    ) / 100.0


if __name__ == "__main__":
    key = jax.random.PRNGKey(0)
    k_out, k_tgt, k_out2, k_tgt2 = jax.random.split(key, 4)

    # small test 1: single-tile path
    N, C = 8, 32
    output = jax.random.normal(k_out, (N, C), dtype=jnp.float32)
    target = jax.random.randint(k_tgt, (N,), 0, C, dtype=jnp.int32)
    beta = 2.0

    loss = jax.block_until_ready(mcl_forward(output, target, beta))
    ref = _mcl_reference(output, target, beta)
    assert jnp.allclose(loss, ref, rtol=1e-5, atol=1e-6), (loss, ref)

    # small test 2: force a tiny tile to exercise the multi-tile grid, the
    # 2-way parallel split with a clamped duplicate tile, and the edge-tile mask.
    N2, C2 = 37, 32
    output2 = jax.random.normal(k_out2, (N2, C2), dtype=jnp.float32)
    target2 = jax.random.randint(k_tgt2, (N2,), 0, C2, dtype=jnp.int32)
    loss2 = jax.block_until_ready(mcl_forward(output2, target2, beta, tile_n=8))
    ref2 = _mcl_reference(output2, target2, beta)
    assert jnp.allclose(loss2, ref2, rtol=1e-5, atol=1e-6), (loss2, ref2)

    print("KERNEL_OK")
</pallas_src>

<mosaic_0001>
module attributes {stable_mosaic.version = 11 : i64} {
  func.func @_mcl_kernel(%arg0: i32, %arg1: i32, %arg2: memref<2xf32, #tpu.memory_space<smem>>, %arg3: memref<8x1xi32, #tpu.memory_space<vmem>>, %arg4: memref<8x32xf32, #tpu.memory_space<vmem>>, %arg5: memref<1x1x1xf32, #tpu.memory_space<vmem>>) attributes {dimension_semantics = [#tpu.dimension_semantics<parallel>, #tpu.dimension_semantics<arbitrary>], iteration_bounds = array<i64: 2, 1>, scalar_prefetch = 1 : i64, scratch_operands = 0 : i64, tpu.core_type = #tpu.core_type<tc>, window_params = [{transform_indices = @transform_0, window_bounds = array<i64: 8, 1>}, {transform_indices = @transform_1, window_bounds = array<i64: 8, 32>}, {transform_indices = @transform_2, window_bounds = array<i64: 1, 1, 1>}]} {
    %c1_i32 = arith.constant 1 : i32
    %0 = arith.muli %arg0, %c1_i32 : i32
    %1 = arith.addi %0, %arg1 : i32
    %c0_i32 = arith.constant 0 : i32
    %2 = arith.cmpi eq, %arg1, %c0_i32 : i32
    %3 = arith.extui %2 : i1 to i32
    %c0_i32_0 = arith.constant 0 : i32
    %4 = arith.cmpi ne, %3, %c0_i32_0 : i32
    scf.if %4 {
      %cst_12 = arith.constant 0.000000e+00 : f32
      %37 = vector.broadcast %cst_12 : f32 to vector<1x1x1xf32>
      %c0_13 = arith.constant 0 : index
      %c0_14 = arith.constant 0 : index
      %c0_15 = arith.constant 0 : index
      %38 = vector.load %arg5[%c0_13, %c0_14, %c0_15] : memref<1x1x1xf32, #tpu.memory_space<vmem>>, vector<1x1x1xf32>
      tpu.vector_store %arg5[%c0_13, %c0_14, %c0_15], %37 {strides = array<i32>} : memref<1x1x1xf32, #tpu.memory_space<vmem>>, vector<1x1x1xf32>,
    } else {
    }
    %c0 = arith.constant 0 : index
    %c0_1 = arith.constant 0 : index
    %5 = vector.load %arg4[%c0, %c0_1] : memref<8x32xf32, #tpu.memory_space<vmem>>, vector<8x32xf32>
    %c0_2 = arith.constant 0 : index
    %c0_3 = arith.constant 0 : index
    %6 = vector.load %arg3[%c0_2, %c0_3] : memref<8x1xi32, #tpu.memory_space<vmem>>, vector<8x1xi32>
    %7 = tpu.iota {dimensions = array<i32: 1>} : vector<1x32xi32>
    %8 = vector.broadcast %7 : vector<1x32xi32> to vector<8x32xi32>
    %9 = vector.broadcast %6 : vector<8x1xi32> to vector<8x32xi32>
    %10 = arith.cmpi eq, %8, %9 : vector<8x32xi32>
    %cst = arith.constant 0.000000e+00 : f32
    %11 = vector.broadcast %cst : f32 to vector<8x32xf32>
    %12 = arith.select %10, %5, %11 : vector<8x32xi1>, vector<8x32xf32>
    %cst_4 = arith.constant dense<0.000000e+00> : vector<8xf32>
    %13 = vector.multi_reduction <add>, %12, %cst_4 [1] : vector<8x32xf32> to vector<8xf32>
    %14 = vector.shape_cast %13 : vector<8xf32> to vector<8x1xf32>
    %cst_5 = arith.constant 7.000000e+01 : f32
    %15 = vector.broadcast %cst_5 : f32 to vector<8x1xf32>
    %16 = arith.addf %14, %15 : vector<8x1xf32>
    %17 = vector.broadcast %16 : vector<8x1xf32> to vector<8x32xf32>
    %18 = arith.subf %5, %17 : vector<8x32xf32>
    %19 = math.exp %18 : vector<8x32xf32>
    %cst_6 = arith.constant dense<0.000000e+00> : vector<8xf32>
    %20 = vector.multi_reduction <add>, %19, %cst_6 [1] : vector<8x32xf32> to vector<8xf32>
    %21 = vector.shape_cast %20 : vector<8xf32> to vector<8x1xf32>
    %c0_7 = arith.constant 0 : index
    %22 = memref.load %arg2[%c0_7] : memref<2xf32, #tpu.memory_space<smem>>
    %c1 = arith.constant 1 : index
    %23 = memref.load %arg2[%c1] : memref<2xf32, #tpu.memory_space<smem>>
    %24 = vector.broadcast %22 : f32 to vector<8x1xf32>
    %25 = arith.addf %21, %24 : vector<8x1xf32>
    %26 = math.log %25 : vector<8x1xf32>
    %cst_8 = arith.constant 7.000000e+01 : f32
    %27 = vector.broadcast %cst_8 : f32 to vector<8x1xf32>
    %28 = arith.addf %26, %27 : vector<8x1xf32>
    %29 = vector.broadcast %23 : f32 to vector<8x1xf32>
    %30 = arith.subf %28, %29 : vector<8x1xf32>
    %c0_i32_9 = arith.constant 0 : i32
    %31 = arith.cmpi sge, %1, %c0_i32_9 : i32
    %true = arith.constant true
    %32 = arith.xori %31, %true : i1
    %33 = arith.extui %32 : i1 to i32
    %c0_i32_10 = arith.constant 0 : i32
    %34 = arith.cmpi ne, %33, %c0_i32_10 : i32
    scf.if %34 {
      %c0_12 = arith.constant 0 : index
      %c0_13 = arith.constant 0 : index
      %c0_14 = arith.constant 0 : index
      %37 = vector.load %arg5[%c0_12, %c0_13, %c0_14] : memref<1x1x1xf32, #tpu.memory_space<vmem>>, vector<1x1x1xf32>
      %38 = vector.shape_cast %30 : vector<8x1xf32> to vector<1x8x1xf32>
      %cst_15 = arith.constant dense<0.000000e+00> : vector<1xf32>
      %39 = vector.multi_reduction <add>, %38, %cst_15 [1, 2] : vector<1x8x1xf32> to vector<1xf32>
      %40 = vector.shape_cast %39 : vector<1xf32> to vector<1x1x1xf32>
      %41 = vector.extract %40[0, 0, 0] : f32 from vector<1x1x1xf32>
      %42 = vector.broadcast %41 : f32 to vector<1x1x1xf32>
      %43 = arith.addf %37, %42 : vector<1x1x1xf32>
      %c0_16 = arith.constant 0 : index
      %c0_17 = arith.constant 0 : index
      %c0_18 = arith.constant 0 : index
      %44 = vector.load %arg5[%c0_16, %c0_17, %c0_18] : memref<1x1x1xf32, #tpu.memory_space<vmem>>, vector<1x1x1xf32>
      tpu.vector_store %arg5[%c0_16, %c0_17, %c0_18], %43 {strides = array<i32>} : memref<1x1x1xf32, #tpu.memory_space<vmem>>, vector<1x1x1xf32>,
    } else {
    }
    %35 = arith.extui %31 : i1 to i32
    %c0_i32_11 = arith.constant 0 : i32
    %36 = arith.cmpi ne, %35, %c0_i32_11 : i32
    scf.if %36 {
      %c8_i32 = arith.constant 8 : i32
      %37 = arith.muli %1, %c8_i32 : i32
      %38 = tpu.iota {dimensions = array<i32: 0>} : vector<8x1xi32>
      %39 = vector.broadcast %37 : i32 to vector<8x1xi32>
      %40 = arith.addi %39, %38 : vector<8x1xi32>
      %c0_12 = arith.constant 0 : index
      %c0_13 = arith.constant 0 : index
      %c0_14 = arith.constant 0 : index
      %41 = vector.load %arg5[%c0_12, %c0_13, %c0_14] : memref<1x1x1xf32, #tpu.memory_space<vmem>>, vector<1x1x1xf32>
      %c8_i32_15 = arith.constant 8 : i32
      %42 = vector.broadcast %c8_i32_15 : i32 to vector<8x1xi32>
      %43 = arith.cmpi slt, %40, %42 : vector<8x1xi32>
      %cst_16 = arith.constant 0.000000e+00 : f32
      %44 = vector.broadcast %cst_16 : f32 to vector<8x1xf32>
      %45 = arith.select %43, %30, %44 : vector<8x1xi1>, vector<8x1xf32>
      %46 = vector.shape_cast %45 : vector<8x1xf32> to vector<1x8x1xf32>
      %cst_17 = arith.constant dense<0.000000e+00> : vector<1xf32>
      %47 = vector.multi_reduction <add>, %46, %cst_17 [1, 2] : vector<1x8x1xf32> to vector<1xf32>
      %48 = vector.shape_cast %47 : vector<1xf32> to vector<1x1x1xf32>
      %49 = vector.extract %48[0, 0, 0] : f32 from vector<1x1x1xf32>
      %50 = vector.broadcast %49 : f32 to vector<1x1x1xf32>
      %51 = arith.addf %41, %50 : vector<1x1x1xf32>
      %c0_18 = arith.constant 0 : index
      %c0_19 = arith.constant 0 : index
      %c0_20 = arith.constant 0 : index
      %52 = vector.load %arg5[%c0_18, %c0_19, %c0_20] : memref<1x1x1xf32, #tpu.memory_space<vmem>>, vector<1x1x1xf32>
      tpu.vector_store %arg5[%c0_18, %c0_19, %c0_20], %51 {strides = array<i32>} : memref<1x1x1xf32, #tpu.memory_space<vmem>>, vector<1x1x1xf32>,
    } else {
    }
    return
  }
  func.func @transform_0(%arg0: i32, %arg1: i32, %arg2: memref<2xf32, #tpu.memory_space<smem>>) -> (i32, i32) {
    %c1_i32 = arith.constant 1 : i32
    %0 = arith.muli %arg0, %c1_i32 : i32
    %1 = arith.addi %0, %arg1 : i32
    %c0_i32 = arith.constant 0 : i32
    %2 = arith.minsi %1, %c0_i32 : i32
    %c0_i32_0 = arith.constant 0 : i32
    %c0_i32_1 = arith.constant 0 : i32
    return %2, %c0_i32_0 : i32, i32
  }
  func.func @transform_1(%arg0: i32, %arg1: i32, %arg2: memref<2xf32, #tpu.memory_space<smem>>) -> (i32, i32) {
    %c1_i32 = arith.constant 1 : i32
    %0 = arith.muli %arg0, %c1_i32 : i32
    %1 = arith.addi %0, %arg1 : i32
    %c0_i32 = arith.constant 0 : i32
    %2 = arith.minsi %1, %c0_i32 : i32
    %c0_i32_0 = arith.constant 0 : i32
    %c0_i32_1 = arith.constant 0 : i32
    return %2, %c0_i32_0 : i32, i32
  }
  func.func @transform_2(%arg0: i32, %arg1: i32, %arg2: memref<2xf32, #tpu.memory_space<smem>>) -> (i32, i32, i32) {
    %c0_i32 = arith.constant 0 : i32
    %c0_i32_0 = arith.constant 0 : i32
    %c0_i32_1 = arith.constant 0 : i32
    return %arg0, %c0_i32, %c0_i32_0 : i32, i32, i32
  }
}

</mosaic_0001>

<llo_original>
// kernel: tpu_custom_call.1
$region0: #{tpu_custom_call.1}
  #allocation0 [shape = 'u32[]', space=smem, size = 0x4, offset = 0x4, fixed_abs, tag = 'smem constant byte address 0x4 - core index']
  #allocation1 [shape = 'u32[144,128]{1,0:T(1,128)}', space=vmem, size = 0x12000, scoped, tag = 'internal scratch']
  #allocation2 [shape = 's32[1]{0}', space=sflag, size = 0x4, scoped, tag = 'scoped memory for tpu_custom_call.1']
  #allocation3 [shape = 'u8[512]{0}', space=smem, size = 0x200, scoped, tag = 'prefetched SMEM operand 0']
  %s0 = inlined_call_operand.vmem [shape: f32[2], index: 0, kind: input, shape index: {}]
  %s1 = inlined_call_operand.vmem [shape: s32[8,1], index: 1, kind: input, shape index: {}]
  %s2 = inlined_call_operand.vmem [shape: f32[8,32], index: 2, kind: input, shape index: {}]
  %s3 = inlined_call_operand.vmem [shape: f32[2,1,1], index: 3, kind: output, shape index: {}]
  %s4 = sld [smem:[#allocation0]]
  $region53: #{tpu_custom_call.1} parent=0
    _
  %s6 = ssub.s32 1, %s4
  %s7 = scalar_select 0, %s6, %s4
  %s8 = sshll.u32 %s0, 4
  %s9 = int_to_ptr.vmem [resolvable:$true] %s8
  %11 = dma.vmem_to_smem %s9, 16, [#allocation3], [#allocation2]
  %12 = dma.done [#allocation2], 16
  %13 = sfence
  loop: start=0, step=1, limit=4
  $region2: #{tpu_custom_call.1} parent=0 // loop_pre_header
    _
  $region3: #{tpu_custom_call.1} parent=0 // loop_header
    %s15 = sphi 0, %s19
    %p16 = scmp.ge.s32.totalorder %s15, 4
    %s22 = sphi 0, %s34
    %s23 = sphi 0, %s30
    %s24 = sphi 0, %s22
    %s25 = sphi 0, %s23
    %s26 = sphi 0, %s24
    %s27 = sphi 0, %s25
    %s43 = sphi 0, %s45
    %s46 = sphi 0, %s43
    %s47 = sphi 0, %s46
    %s63 = sphi 0, %s47
    %s75 = sphi 0, %s77
    %s78 = sphi 0, %s75
    %s79 = sphi 0, %s78
    %s95 = sphi 0, %s79
    %s101 = sphi 0, %s103
    %s104 = sphi 0, %s101
    %s105 = sphi 0, %s104
    %s121 = sphi 0, %s105
  $region4: #{tpu_custom_call.1} parent=0 // loop_header_branch
    %18 = sbr.rel (%p16) target = $region8
  $region5: #{tpu_custom_call.1} parent=0 // loop_body
    %s20 = ssub.s32 %s15, 1
    %s21 = ssub.s32 %s15, 2
    %s28 = sadd.s32 1, %s23
    %p29 = scmp.ge.s32.totalorder %s28, 1
    %s30 = scalar_select %p29, 0, %s28
    %s31 = sadd.s32 1, %s22
    %s32 = scalar_select %p29, %s31, %s22
    %p33 = scmp.ge.s32.totalorder %s32, 2
    %s34 = scalar_select %p33, 0, %s32
    %s35 = sadd.s32 %s22, %s23
    %p36 = scmp.lt.s32.totalorder %s35, 0
    %s37 = scalar_select %p36, %s35, 0
    %s38 = sadd.s32 %s34, %s30
    %p39 = scmp.lt.s32.totalorder %s38, 0
    %s40 = scalar_select %p39, %s38, 0
    %s41 = ssub.s32 %s37, %s40
    %p42 = scmp.eq.s32.totalorder %s41, 0
    %s44 = sadd.s32 %s43, 1
    %s45 = scalar_select %p42, %s43, %s44
    %p48 = pneg %p42
    %p49 = scmp.eq.s32.totalorder %s15, 1
    %p50 = por %p48, %p49
    %p51 = scmp.ne.s32.totalorder %s43, %s46
    %p52 = scmp.eq.s32.totalorder %s15, 0
    %p53 = por %p51, %p52
    %p54 = scmp.ne.s32.totalorder %s43, %s46
    %p55 = scmp.eq.s32.totalorder %s20, 1
    %p56 = por %p54, %p55
    %p57 = scmp.ne.s32.totalorder %s46, %s47
    %p58 = scmp.eq.s32.totalorder %s20, 0
    %p59 = por %p57, %p58
    %p60 = scmp.ne.s32.totalorder %s46, %s47
    %p61 = scmp.eq.s32.totalorder %s21, 1
    %p62 = por %p60, %p61
    %p64 = scmp.ne.s32.totalorder %s47, %s63
    %p65 = scmp.eq.s32.totalorder %s21, 0
    %p66 = por %p64, %p65
    %s67 = sadd.s32 %s22, %s23
    %p68 = scmp.lt.s32.totalorder %s67, 0
    %s69 = scalar_select %p68, %s67, 0
    %s70 = sadd.s32 %s34, %s30
    %p71 = scmp.lt.s32.totalorder %s70, 0
    %s72 = scalar_select %p71, %s70, 0
    %s73 = ssub.s32 %s69, %s72
    %p74 = scmp.eq.s32.totalorder %s73, 0
    %s76 = sadd.s32 %s75, 1
    %s77 = scalar_select %p74, %s75, %s76
    %p80 = pneg %p74
    %p81 = scmp.eq.s32.totalorder %s15, 1
    %p82 = por %p80, %p81
    %p83 = scmp.ne.s32.totalorder %s75, %s78
    %p84 = scmp.eq.s32.totalorder %s15, 0
    %p85 = por %p83, %p84
    %p86 = scmp.ne.s32.totalorder %s75, %s78
    %p87 = scmp.eq.s32.totalorder %s20, 1
    %p88 = por %p86, %p87
    %p89 = scmp.ne.s32.totalorder %s78, %s79
    %p90 = scmp.eq.s32.totalorder %s20, 0
    %p91 = por %p89, %p90
    %p92 = scmp.ne.s32.totalorder %s78, %s79
    %p93 = scmp.eq.s32.totalorder %s21, 1
    %p94 = por %p92, %p93
    %p96 = scmp.ne.s32.totalorder %s79, %s95
    %p97 = scmp.eq.s32.totalorder %s21, 0
    %p98 = por %p96, %p97
    %s99 = ssub.s32 %s22, %s34
    %p100 = scmp.eq.s32.totalorder %s99, 0
    %s102 = sadd.s32 %s101, 1
    %s103 = scalar_select %p100, %s101, %s102
    %p106 = pneg %p100
    %p107 = scmp.eq.s32.totalorder %s15, 1
    %p108 = por %p106, %p107
    %p109 = scmp.ne.s32.totalorder %s101, %s104
    %p110 = scmp.eq.s32.totalorder %s15, 0
    %p111 = por %p109, %p110
    %p112 = scmp.ne.s32.totalorder %s101, %s104
    %p113 = scmp.eq.s32.totalorder %s20, 1
    %p114 = por %p112, %p113
    %p115 = scmp.ne.s32.totalorder %s104, %s105
    %p116 = scmp.eq.s32.totalorder %s20, 0
    %p117 = por %p115, %p116
    %p118 = scmp.ne.s32.totalorder %s104, %s105
    %p119 = scmp.eq.s32.totalorder %s21, 1
    %p120 = por %p118, %p119
    %p122 = scmp.ne.s32.totalorder %s105, %s121
    %p123 = scmp.eq.s32.totalorder %s21, 0
    %p124 = por %p122, %p123
    %p125 = scmp.le.s32.totalorder 1, %s15
    %p126 = scmp.lt.s32.totalorder %s15, 3
    %p127 = pnand %p125, %p126
    %p128 = pneg %p127
    // Predicated region
    $region9: #{tpu_custom_call.1} parent=5 // pred_check
      _
    $region10: #{tpu_custom_call.1} parent=5 // pred_check_branch
      %130 = sbr.rel (%p127) target = $region12
    $region11: #{tpu_custom_call.1} parent=5 // pred_region
      %s131 = ssub.s32 %s15, 1
    $region12: #{tpu_custom_call.1} parent=5 // pred_fallthru
      _
    %p132 = scmp.lt.s32.totalorder %s15, 2
    // Predicated region
    $region13: #{tpu_custom_call.1} parent=5 // pred_check
      %p133 = pneg %p132
    $region14: #{tpu_custom_call.1} parent=5 // pred_check_branch
      %135 = sbr.rel (%p133) target = $region16
    $region15: #{tpu_custom_call.1} parent=5 // pred_region
      // Predicated region
      $region17: #{tpu_custom_call.1} parent=15 // pred_check
        %p136 = pneg %p53
      $region18: #{tpu_custom_call.1} parent=15 // pred_check_branch
        %138 = sbr.rel (%p136) target = $region20
      $region19: #{tpu_custom_call.1} parent=15 // pred_region
        %s139 = sadd.s32 %s22, %s23
        %p140 = scmp.lt.s32.totalorder %s139, 0
        %s141 = scalar_select %p140, %s139, 0
        %p142 = scmp.lt.s32.totalorder %s141, 0
        %s143 = scalar_select %p142, %s141, 0
        %s144 = smul.addr %s143, 8
        %s145 = scalar_lea.vmem %s1, %s144
        %s146 = sadd.s32 %s22, %s23
        %p147 = scmp.lt.s32.totalorder %s146, 0
        %s148 = scalar_select %p147, %s146, 0
      $region20: #{tpu_custom_call.1} parent=15 // pred_fallthru
        _
      // Predicated region
      $region21: #{tpu_custom_call.1} parent=15 // pred_check
        %p149 = pneg %p85
      $region22: #{tpu_custom_call.1} parent=15 // pred_check_branch
        %151 = sbr.rel (%p149) target = $region24
      $region23: #{tpu_custom_call.1} parent=15 // pred_region
        %s152 = sadd.s32 %s22, %s23
        %p153 = scmp.lt.s32.totalorder %s152, 0
        %s154 = scalar_select %p153, %s152, 0
        %p155 = scmp.lt.s32.totalorder %s154, 0
        %s156 = scalar_select %p155, %s154, 0
        %s157 = smul.addr %s156, 8
        %s158 = scalar_lea.vmem %s2, %s157
        %s159 = sadd.s32 %s22, %s23
        %p160 = scmp.lt.s32.totalorder %s159, 0
        %s161 = scalar_select %p160, %s159, 0
      $region24: #{tpu_custom_call.1} parent=15 // pred_fallthru
        _
    $region16: #{tpu_custom_call.1} parent=5 // pred_fallthru
      _
    %p162 = scmp.le.s32.totalorder 1, %s15
    %p163 = scmp.lt.s32.totalorder %s15, 3
    %p164 = pnand %p162, %p163
    %p165 = pneg %p164
    // Predicated region
    $region25: #{tpu_custom_call.1} parent=5 // pred_check
      _
    $region26: #{tpu_custom_call.1} parent=5 // pred_check_branch
      %167 = sbr.rel (%p164) target = $region28
    $region27: #{tpu_custom_call.1} parent=5 // pred_region
      %s168 = ssub.s32 %s15, 1
      %s169 = sadd.s32 %s24, %s25
      %p170 = scmp.lt.s32.totalorder %s169, 0
      %s171 = scalar_select %p170, %s169, 0
      %p172 = scmp.lt.s32.totalorder %s171, 0
      %s173 = scalar_select %p172, %s171, 0
      %s174 = smul.addr %s173, 8
      %s175 = scalar_lea.vmem %s1, %s174
      %p176 = pneg %p59
      %p177 = pneg %p56
      %s178 = sadd.s32 %s24, %s25
      %p179 = scmp.lt.s32.totalorder %s178, 0
      %s180 = scalar_select %p179, %s178, 0
      %p181 = scmp.lt.s32.totalorder %s180, 0
      %s182 = scalar_select %p181, %s180, 0
      %s183 = smul.addr %s182, 8
      %s184 = scalar_lea.vmem %s2, %s183
      %p185 = pneg %p91
      %p186 = pneg %p88
      %p187 = pneg %p117
      %p188 = pneg %p114
      %p189 = scmp.lt.s32.totalorder %s24, 1
      %s190 = scalar_select %p189, %s24, 1
      %s191 = scalar_lea.vmem %s3, %s190
      %s192 = sadd.s32 %s24, %s25
      %p193 = scmp.lt.s32.totalorder %s192, 0
      %s194 = scalar_select %p193, %s192, 0
      %p195 = scmp.lt.s32.totalorder %s194, 0
      %s196 = scalar_select %p195, %s194, 0
      %s197 = smul.addr %s196, 8
      %s198 = scalar_lea.vmem %s1, %s197
      %s199 = sadd.s32 %s24, %s25
      %p200 = scmp.lt.s32.totalorder %s199, 0
      %s201 = scalar_select %p200, %s199, 0
      %s202 = sadd.s32 %s24, %s25
      %p203 = scmp.lt.s32.totalorder %s202, 0
      %s204 = scalar_select %p203, %s202, 0
      %p205 = scmp.lt.s32.totalorder %s204, 0
      %s206 = scalar_select %p205, %s204, 0
      %s207 = smul.addr %s206, 8
      %s208 = scalar_lea.vmem %s2, %s207
      %s209 = sadd.s32 %s24, %s25
      %p210 = scmp.lt.s32.totalorder %s209, 0
      %s211 = scalar_select %p210, %s209, 0
      %p212 = scmp.lt.s32.totalorder %s24, 1
      %s213 = scalar_select %p212, %s24, 1
      %s214 = scalar_lea.vmem %s3, %s213
      %s215 = sadd.s32 %s24, %s25
      %p216 = scmp.eq.s32.totalorder %s25, 0
      // Predicated region
      $region29: #{tpu_custom_call.1} parent=27 // pred_check
        %p217 = pneg %p216
      $region30: #{tpu_custom_call.1} parent=27 // pred_check_branch
        %219 = sbr.rel (%p217) target = $region32
      $region31: #{tpu_custom_call.1} parent=27 // pred_region
        %vm220 = vcmask 0
        %221 = vst.msk [vmem:[%s214] sm:$0x1] %vm220, 0.0
      $region32: #{tpu_custom_call.1} parent=27 // pred_fallthru
        _
      %v222 = vld [vmem:[%s208] sm:$0xff]
      %v223 = vld [vmem:[%s198] sm:$0xff]
      %v224 = vlaneseq
      %v225 = vand.u32 %v224, 127
      %226 = vset.pattern.permute.xlu0 0
      %227 = vperm.xlu0 %226, %v223
      %v228 = vpop.permute.xlu0 %227
      %vm229 = vcmp.eq.s32.totalorder %v225, %v228
      %v230 = vsel %vm229, %v222, 0.0
      %vm231 = vcmask 261120
      %v232 = vsel %vm231, %v230, 0.0
      %233 = vadd.xlane.f32.xlu0 %v232
      %v234 = vpop.xlane.xlu0 %233
      %v235 = vadd.f32 %v234, 70.0
      %v236 = vsub.f32 %v222, %v235
      %v237 = vmul.f32 %v236, 1.442695
      %v238 = vpow.pop %v237
      %v239 = vsel %vm231, %v238, 0.0
      %240 = vadd.xlane.f32.xlu0 %v239
      %v241 = vpop.xlane.xlu0 %240
      %s242 = sld [smem:[#allocation3]]
      %s243 = sld [smem:[#allocation3 + $0x1]]
      %v244 = vstv %s242
      %v245 = vadd.f32 %v241, %v244
      %v246 = vlog2.pop %v245
      %v247 = vmul.f32 %v246, 0.6931472
      %v248 = vadd.f32 %v247, 70.0
      %v249 = vstv %s243
      %v250 = vsub.f32 %v248, %v249
      %p251 = scmp.ge.s32.totalorder %s215, 0
      %p252 = scmp.lt.s32.totalorder %s215, 0
      // Predicated region
      $region33: #{tpu_custom_call.1} parent=27 // pred_check
        %p253 = pneg %p252
      $region34: #{tpu_custom_call.1} parent=27 // pred_check_branch
        %255 = sbr.rel (%p253) target = $region36
      $region35: #{tpu_custom_call.1} parent=27 // pred_region
        %v256 = vld [vmem:[%s214] sm:$0x1]
        %vm257 = vcmask 7168
        %v258 = vsel %vm257, %v250, 0.0
        %259 = vadd.xlane.f32.xlu0 %v258
        %v260 = vpop.xlane.xlu0 %259
        %v261 = vrot.slane %v260, 4
        %v262 = vadd.f32 %v260, %v261
        %v263 = vrot.slane %v262, 2
        %v264 = vadd.f32 %v262, %v263
        %v265 = vrot.slane %v264, 1
        %v266 = vadd.f32 %v264, %v265
        %s267 = vtos %v266
        %v268 = vstv %s267
        %v269 = vadd.f32 %v256, %v268
        %vm270 = vcmask 0
        %271 = vst.msk [vmem:[%s214] sm:$0x1] %vm270, %v269
      $region36: #{tpu_custom_call.1} parent=27 // pred_fallthru
        _
      // Predicated region
      $region37: #{tpu_custom_call.1} parent=27 // pred_check
        %p272 = pneg %p251
      $region38: #{tpu_custom_call.1} parent=27 // pred_check_branch
        %274 = sbr.rel (%p272) target = $region40
      $region39: #{tpu_custom_call.1} parent=27 // pred_region
        %s275 = smul.u32 %s215, 8
        %v276 = vlaneseq
        %v277 = vshrl.u32 %v276, 7
        %v278 = vstv %s275
        %v279 = vadd.s32 %v278, %v277
        %v280 = vld [vmem:[%s214] sm:$0x1]
        %vm281 = vcmp.lt.s32.totalorder %v279, 8
        %v282 = vsel %vm281, %v250, 0.0
        %vm283 = vcmask 7168
        %v284 = vsel %vm283, %v282, 0.0
        %285 = vadd.xlane.f32.xlu0 %v284
        %v286 = vpop.xlane.xlu0 %285
        %v287 = vrot.slane %v286, 4
        %v288 = vadd.f32 %v286, %v287
        %v289 = vrot.slane %v288, 2
        %v290 = vadd.f32 %v288, %v289
        %v291 = vrot.slane %v290, 1
        %v292 = vadd.f32 %v290, %v291
        %s293 = vtos %v292
        %v294 = vstv %s293
        %v295 = vadd.f32 %v280, %v294
        %vm296 = vcmask 0
        %297 = vst.msk [vmem:[%s214] sm:$0x1] %vm296, %v295
      $region40: #{tpu_custom_call.1} parent=27 // pred_fallthru
        _
      %p298 = scmp.lt.s32.totalorder %s24, 1
      %s299 = scalar_select %p298, %s24, 1
      %s300 = scalar_lea.vmem %s3, %s299
      // Predicated region
      $region41: #{tpu_custom_call.1} parent=27 // pred_check
        %p301 = pneg %p114
      $region42: #{tpu_custom_call.1} parent=27 // pred_check_branch
        %303 = sbr.rel (%p301) target = $region44
      $region43: #{tpu_custom_call.1} parent=27 // pred_region
        _
      $region44: #{tpu_custom_call.1} parent=27 // pred_fallthru
        _
    $region28: #{tpu_custom_call.1} parent=5 // pred_fallthru
      _
    %p304 = scmp.le.s32.totalorder 2, %s15
    // Predicated region
    $region45: #{tpu_custom_call.1} parent=5 // pred_check
      %p305 = pneg %p304
    $region46: #{tpu_custom_call.1} parent=5 // pred_check_branch
      %307 = sbr.rel (%p305) target = $region48
    $region47: #{tpu_custom_call.1} parent=5 // pred_region
      %s308 = ssub.s32 %s15, 2
      // Predicated region
      $region49: #{tpu_custom_call.1} parent=47 // pred_check
        %p309 = pneg %p120
      $region50: #{tpu_custom_call.1} parent=47 // pred_check_branch
        %311 = sbr.rel (%p309) target = $region52
      $region51: #{tpu_custom_call.1} parent=47 // pred_region
        %p312 = scmp.lt.s32.totalorder %s26, 1
        %s313 = scalar_select %p312, %s26, 1
        %s314 = scalar_lea.vmem %s3, %s313
      $region52: #{tpu_custom_call.1} parent=47 // pred_fallthru
        _
    $region48: #{tpu_custom_call.1} parent=5 // pred_fallthru
      _
  $region6: #{tpu_custom_call.1} parent=0 // loop_footer
    %s19 = sadd.s32 1, %s15
  $region7: #{tpu_custom_call.1} parent=0 // loop_footer_branch
    %14 = sbr.rel target = $region3
  $region8: #{tpu_custom_call.1} parent=0 // loop_exit
    _

</llo_original>
